<compile_context>
chip_gen: v7x
topology: tpu7x:2x2x1
jax: 0.10.0
libtpu: 0.0.40
codegen_flags: <defaults>
</compile_context>

<pallas_src>
import math
import functools

import jax
import jax.numpy as jnp
from jax.experimental import pallas as pl
from jax.experimental.pallas import tpu as pltpu


def _elu(z):
    # F.elu with default alpha = 1.0
    return jnp.where(z > 0, z, jnp.exp(jnp.minimum(z, 0.0)) - 1.0)


# ---------------------------------------------------------------------------
# Tile-size helpers: pick a hardware-aligned block edge that divides N,
# falling back to the full dimension (block == full dim is always legal).
# ---------------------------------------------------------------------------
def _row_tile(n, target=256, align=8):
    if n <= target:
        return n
    t = (target // align) * align
    while t >= align:
        if n % t == 0:
            return t
        t -= align
    return n  # fallback: whole dimension


def _lane_tile(n, target=512, align=128):
    if n <= target:
        return n
    t = (target // align) * align
    while t >= align:
        if n % t == 0:
            return t
        t -= align
    return n  # fallback: whole dimension


# ---------------------------------------------------------------------------
# Kernel 1: support_all = x @ W_all   ([N, F] @ [F, K*nhid] -> [N, K*nhid])
# ---------------------------------------------------------------------------
def _support_kernel(x_ref, w_ref, o_ref):
    o_ref[...] = jnp.dot(x_ref[...], w_ref[...],
                         preferred_element_type=jnp.float32)


def compute_support(x, w_all, *, row_target=256):
    N, F = x.shape
    KH = w_all.shape[1]
    tm = _row_tile(N, row_target)
    return pl.pallas_call(
        _support_kernel,
        out_shape=jax.ShapeDtypeStruct((N, KH), jnp.float32),
        grid=(N // tm,),
        in_specs=[
            pl.BlockSpec((tm, F), lambda i: (i, 0)),
            pl.BlockSpec((F, KH), lambda i: (0, 0)),
        ],
        out_specs=pl.BlockSpec((tm, KH), lambda i: (i, 0)),
        compiler_params=pltpu.CompilerParams(
            dimension_semantics=("parallel",),
            vmem_limit_bytes=32 * 1024 * 1024,
        ),
    )(x, w_all)


# ---------------------------------------------------------------------------
# Kernel 2: fused K-branch aggregation + classifier head.
#   acc[:, k*H:(k+1)*H] += (adj_tile ** (k+1)) @ support_tile[:, k*H:(k+1)*H]
#   epilogue (last reduction step):
#     h = elu(acc + b_all)                     # per-branch bias + ELU
#     z = elu(h @ lin_w + lin_b)               # generate_module + ELU
#     out = log_softmax(z, axis=1)
# ---------------------------------------------------------------------------
def _agg_head_kernel(adj_ref, sup_ref, b_ref, lw_ref, lb_ref, o_ref,
                     acc_ref, *, K, H):
    j = pl.program_id(1)

    @pl.when(j == 0)
    def _init():
        acc_ref[...] = jnp.zeros_like(acc_ref)

    adj_tile = adj_ref[...]                          # (tm, tk) f32
    sup_bf = sup_ref[...].astype(jnp.bfloat16)       # (tk, K*H)

    pow_buf = adj_tile                               # incremental Hadamard power
    parts = []
    for k in range(K):
        parts.append(
            jnp.dot(pow_buf.astype(jnp.bfloat16),
                    sup_bf[:, k * H:(k + 1) * H],
                    preferred_element_type=jnp.float32))
        if k + 1 < K:
            pow_buf = pow_buf * adj_tile
    acc_ref[...] += jnp.concatenate(parts, axis=1)

    @pl.when(j == pl.num_programs(1) - 1)
    def _finish():
        # per-branch bias + ELU (applied once per row tile, not per k-step)
        h = _elu(acc_ref[...] + b_ref[...])
        # TODO(synk): F.dropout is identity in eval mode; training-mode
        # dropout (random mask + 1/(1-p) scale) is not applied here.
        z = jnp.dot(h, lw_ref[...], preferred_element_type=jnp.float32)
        z = _elu(z + lb_ref[...])
        m = jnp.max(z, axis=1, keepdims=True)
        lse = m + jnp.log(jnp.sum(jnp.exp(z - m), axis=1, keepdims=True))
        o_ref[...] = z - lse


def aggregate_and_classify(adj, support, b_all, lin_w, lin_b, K, H,
                           *, row_target=256, red_target=512):
    N = adj.shape[0]
    KH = support.shape[1]
    C = lin_w.shape[1]
    tm = _row_tile(N, row_target)
    tk = _lane_tile(N, red_target)
    kernel = functools.partial(_agg_head_kernel, K=K, H=H)
    return pl.pallas_call(
        kernel,
        out_shape=jax.ShapeDtypeStruct((N, C), jnp.float32),
        grid=(N // tm, N // tk),
        in_specs=[
            pl.BlockSpec((tm, tk), lambda i, j: (i, j)),   # adj tile
            pl.BlockSpec((tk, KH), lambda i, j: (j, 0)),   # stacked support rows
            pl.BlockSpec((1, KH), lambda i, j: (0, 0)),    # stacked branch biases
            pl.BlockSpec((KH, C), lambda i, j: (0, 0)),    # linear weight
            pl.BlockSpec((1, C), lambda i, j: (0, 0)),     # linear bias
        ],
        out_specs=pl.BlockSpec((tm, C), lambda i, j: (i, 0)),
        scratch_shapes=[pltpu.VMEM((tm, KH), jnp.float32)],
        compiler_params=pltpu.CompilerParams(
            dimension_semantics=("parallel", "arbitrary"),
            vmem_limit_bytes=32 * 1024 * 1024,
        ),
    )(adj, support, b_all, lin_w, lin_b)


# ---------------------------------------------------------------------------
# Parameter init (mirrors the PyTorch init distributions, stacked layout)
# ---------------------------------------------------------------------------
def init_params(key, nfeat, nhid, nclass, K):
    stdv = 1.0 / math.sqrt(nhid)  # NetGraphConvolution.reset_parameters
    ws, bs = [], []
    for _ in range(K):
        key, k1, k2 = jax.random.split(key, 3)
        ws.append(jax.random.uniform(k1, (nfeat, nhid), jnp.float32, -stdv, stdv))
        bs.append(jax.random.uniform(k2, (1, nhid), jnp.float32, -stdv, stdv))
    fan_in = K * nhid
    bound = 1.0 / math.sqrt(fan_in)  # nn.Linear default init bound
    key, k1, k2 = jax.random.split(key, 3)
    return {
        "w_all": jnp.concatenate(ws, axis=1),   # [F, K*nhid]
        "b_all": jnp.concatenate(bs, axis=1),   # [1, K*nhid]
        # stored as [K*nhid, nclass] so the kernel does h @ W (== h @ W_lin.T)
        "lin_w": jax.random.uniform(k1, (fan_in, nclass), jnp.float32,
                                    -bound, bound),
        "lin_b": jax.random.uniform(k2, (1, nclass), jnp.float32,
                                    -bound, bound),
    }


def ngcn_forward(params, x, adj, K, nhid):
    support = compute_support(x, params["w_all"])
    return aggregate_and_classify(adj, support, params["b_all"],
                                  params["lin_w"], params["lin_b"], K, nhid)


# Pure-JAX reference (eval mode), for correctness checking.
def ngcn_reference(params, x, adj, K, nhid):
    hs = []
    for k in range(K):
        wk = params["w_all"][:, k * nhid:(k + 1) * nhid]
        bk = params["b_all"][:, k * nhid:(k + 1) * nhid]
        out = (adj ** (k + 1)) @ (x @ wk) + bk
        hs.append(jax.nn.elu(out))
    h = jnp.concatenate(hs, axis=1)
    z = jax.nn.elu(h @ params["lin_w"] + params["lin_b"])
    return jax.nn.log_softmax(z, axis=1)


if __name__ == "__main__":
    # Shapes consistent with the module's forward: x [N, nfeat], adj [N, N]
    N, nfeat, nhid, nclass, K = 16, 32, 16, 8, 3

    key = jax.random.PRNGKey(0)
    key, kx, ka, kp = jax.random.split(key, 4)
    x = jax.random.normal(kx, (N, nfeat), dtype=jnp.float32)
    adj = jax.random.uniform(ka, (N, N), dtype=jnp.float32)  # dense "sparse" adj

    params = init_params(kp, nfeat, nhid, nclass, K)

    fwd = jax.jit(functools.partial(ngcn_forward, K=K, nhid=nhid))
    out = jax.block_until_ready(fwd(params, x, adj))

    assert out.shape == (N, nclass)
    assert bool(jnp.all(jnp.isfinite(out)))
    # log_softmax rows should exp-sum to ~1
    assert bool(jnp.allclose(jnp.sum(jnp.exp(out), axis=1), 1.0, atol=1e-4))

    # match the pure-JAX reference (bf16 aggregation -> loose tolerance)
    ref = ngcn_reference(params, x, adj, K, nhid)
    assert bool(jnp.allclose(out, ref, atol=5e-2)), \
        float(jnp.max(jnp.abs(out - ref)))

    print("KERNEL_OK")
</pallas_src>

<mosaic_0001>
module attributes {stable_mosaic.version = 11 : i64} {
  func.func @_support_kernel(%arg0: i32, %arg1: memref<16x32xf32, #tpu.memory_space<vmem>>, %arg2: memref<32x48xf32, #tpu.memory_space<vmem>>, %arg3: memref<16x48xf32, #tpu.memory_space<vmem>>) attributes {dimension_semantics = [#tpu.dimension_semantics<parallel>], iteration_bounds = array<i64: 1>, scalar_prefetch = 0 : i64, scratch_operands = 0 : i64, tpu.core_type = #tpu.core_type<tc>, window_params = [{transform_indices = @transform_0, window_bounds = array<i64: 16, 32>}, {pipeline_mode = #tpu.pipeline_mode<synchronous>, transform_indices = @transform_1, window_bounds = array<i64: 32, 48>}, {transform_indices = @transform_2, window_bounds = array<i64: 16, 48>}]} {
    %c0 = arith.constant 0 : index
    %c0_0 = arith.constant 0 : index
    %0 = vector.load %arg1[%c0, %c0_0] : memref<16x32xf32, #tpu.memory_space<vmem>>, vector<16x32xf32>
    %c0_1 = arith.constant 0 : index
    %c0_2 = arith.constant 0 : index
    %1 = vector.load %arg2[%c0_1, %c0_2] : memref<32x48xf32, #tpu.memory_space<vmem>>, vector<32x48xf32>
    %cst = arith.constant dense<0.000000e+00> : vector<16x48xf32>
    %2 = tpu.matmul %0, %1, %cst {dimension_numbers = #tpu.dot_dimension_numbers<[1], [0], [0], [1], [0, 0, 1, 1], [], []>} : vector<16x32xf32>, vector<32x48xf32>, vector<16x48xf32> -> vector<16x48xf32>
    %c0_3 = arith.constant 0 : index
    %c0_4 = arith.constant 0 : index
    %3 = vector.load %arg3[%c0_3, %c0_4] : memref<16x48xf32, #tpu.memory_space<vmem>>, vector<16x48xf32>
    tpu.vector_store %arg3[%c0_3, %c0_4], %2 {strides = array<i32>} : memref<16x48xf32, #tpu.memory_space<vmem>>, vector<16x48xf32>,
    return
  }
  func.func @transform_0(%arg0: i32) -> (i32, i32) {
    %c0_i32 = arith.constant 0 : i32
    %c0_i32_0 = arith.constant 0 : i32
    return %arg0, %c0_i32 : i32, i32
  }
  func.func @transform_1(%arg0: i32) -> (i32, i32) {
    %c0_i32 = arith.constant 0 : i32
    %c0_i32_0 = arith.constant 0 : i32
    %c0_i32_1 = arith.constant 0 : i32
    return %c0_i32, %c0_i32_0 : i32, i32
  }
  func.func @transform_2(%arg0: i32) -> (i32, i32) {
    %c0_i32 = arith.constant 0 : i32
    %c0_i32_0 = arith.constant 0 : i32
    return %arg0, %c0_i32 : i32, i32
  }
}

module attributes {stable_mosaic.version = 11 : i64} {
  func.func @_agg_head_kernel(%arg0: i32, %arg1: i32, %arg2: memref<16x16xf32, #tpu.memory_space<vmem>>, %arg3: memref<16x48xf32, #tpu.memory_space<vmem>>, %arg4: memref<1x48xf32, #tpu.memory_space<vmem>>, %arg5: memref<48x8xf32, #tpu.memory_space<vmem>>, %arg6: memref<1x8xf32, #tpu.memory_space<vmem>>, %arg7: memref<16x8xf32, #tpu.memory_space<vmem>>, %arg8: memref<16x48xf32, #tpu.memory_space<vmem>>) attributes {dimension_semantics = [#tpu.dimension_semantics<parallel>, #tpu.dimension_semantics<arbitrary>], iteration_bounds = array<i64: 1, 1>, scalar_prefetch = 0 : i64, scratch_operands = 1 : i64, tpu.core_type = #tpu.core_type<tc>, window_params = [{transform_indices = @transform_0, window_bounds = array<i64: 16, 16>}, {transform_indices = @transform_1, window_bounds = array<i64: 16, 48>}, {pipeline_mode = #tpu.pipeline_mode<synchronous>, transform_indices = @transform_2, window_bounds = array<i64: 1, 48>}, {pipeline_mode = #tpu.pipeline_mode<synchronous>, transform_indices = @transform_3, window_bounds = array<i64: 48, 8>}, {pipeline_mode = #tpu.pipeline_mode<synchronous>, transform_indices = @transform_4, window_bounds = array<i64: 1, 8>}, {transform_indices = @transform_5, window_bounds = array<i64: 16, 8>}]} {
    %c0_i32 = arith.constant 0 : i32
    %0 = arith.cmpi eq, %arg1, %c0_i32 : i32
    %1 = arith.extui %0 : i1 to i32
    %c0_i32_0 = arith.constant 0 : i32
    %2 = arith.cmpi ne, %1, %c0_i32_0 : i32
    scf.if %2 {
      %cst_12 = arith.constant 0.000000e+00 : f32
      %24 = vector.broadcast %cst_12 : f32 to vector<16x48xf32>
      %c0_13 = arith.constant 0 : index
      %c0_14 = arith.constant 0 : index
      %25 = vector.load %arg8[%c0_13, %c0_14] : memref<16x48xf32, #tpu.memory_space<vmem>>, vector<16x48xf32>
      tpu.vector_store %arg8[%c0_13, %c0_14], %24 {strides = array<i32>} : memref<16x48xf32, #tpu.memory_space<vmem>>, vector<16x48xf32>,
    } else {
    }
    %c0 = arith.constant 0 : index
    %c0_1 = arith.constant 0 : index
    %3 = vector.load %arg2[%c0, %c0_1] : memref<16x16xf32, #tpu.memory_space<vmem>>, vector<16x16xf32>
    %c0_2 = arith.constant 0 : index
    %c0_3 = arith.constant 0 : index
    %4 = vector.load %arg3[%c0_2, %c0_3] : memref<16x48xf32, #tpu.memory_space<vmem>>, vector<16x48xf32>
    %5 = arith.truncf %4 : vector<16x48xf32> to vector<16x48xbf16>
    %6 = arith.truncf %3 : vector<16x16xf32> to vector<16x16xbf16>
    %7 = vector.extract_strided_slice %5 {offsets = [0, 0], sizes = [16, 16], strides = [1, 1]} : vector<16x48xbf16> to vector<16x16xbf16>
    %cst = arith.constant dense<0.000000e+00> : vector<16x16xf32>
    %8 = tpu.matmul %6, %7, %cst {dimension_numbers = #tpu.dot_dimension_numbers<[1], [0], [0], [1], [0, 0, 1, 1], [], []>} : vector<16x16xbf16>, vector<16x16xbf16>, vector<16x16xf32> -> vector<16x16xf32>
    %9 = arith.mulf %3, %3 : vector<16x16xf32>
    %10 = arith.truncf %9 : vector<16x16xf32> to vector<16x16xbf16>
    %11 = vector.extract_strided_slice %5 {offsets = [0, 16], sizes = [16, 16], strides = [1, 1]} : vector<16x48xbf16> to vector<16x16xbf16>
    %cst_4 = arith.constant dense<0.000000e+00> : vector<16x16xf32>
    %12 = tpu.matmul %10, %11, %cst_4 {dimension_numbers = #tpu.dot_dimension_numbers<[1], [0], [0], [1], [0, 0, 1, 1], [], []>} : vector<16x16xbf16>, vector<16x16xbf16>, vector<16x16xf32> -> vector<16x16xf32>
    %13 = arith.mulf %9, %3 : vector<16x16xf32>
    %14 = arith.truncf %13 : vector<16x16xf32> to vector<16x16xbf16>
    %15 = vector.extract_strided_slice %5 {offsets = [0, 32], sizes = [16, 16], strides = [1, 1]} : vector<16x48xbf16> to vector<16x16xbf16>
    %cst_5 = arith.constant dense<0.000000e+00> : vector<16x16xf32>
    %16 = tpu.matmul %14, %15, %cst_5 {dimension_numbers = #tpu.dot_dimension_numbers<[1], [0], [0], [1], [0, 0, 1, 1], [], []>} : vector<16x16xbf16>, vector<16x16xbf16>, vector<16x16xf32> -> vector<16x16xf32>
    %c0_6 = arith.constant 0 : index
    %c0_7 = arith.constant 0 : index
    %17 = vector.load %arg8[%c0_6, %c0_7] : memref<16x48xf32, #tpu.memory_space<vmem>>, vector<16x48xf32>
    %18 = tpu.concatenate %8, %12, %16 in 1 : vector<16x16xf32>, vector<16x16xf32>, vector<16x16xf32> -> vector<16x48xf32>
    %19 = arith.addf %17, %18 : vector<16x48xf32>
    %c0_8 = arith.constant 0 : index
    %c0_9 = arith.constant 0 : index
    %20 = vector.load %arg8[%c0_8, %c0_9] : memref<16x48xf32, #tpu.memory_space<vmem>>, vector<16x48xf32>
    tpu.vector_store %arg8[%c0_8, %c0_9], %19 {strides = array<i32>} : memref<16x48xf32, #tpu.memory_space<vmem>>, vector<16x48xf32>,
    %c0_i32_10 = arith.constant 0 : i32
    %21 = arith.cmpi eq, %arg1, %c0_i32_10 : i32
    %22 = arith.extui %21 : i1 to i32
    %c0_i32_11 = arith.constant 0 : i32
    %23 = arith.cmpi ne, %22, %c0_i32_11 : i32
    scf.if %23 {
      %c0_12 = arith.constant 0 : index
      %c0_13 = arith.constant 0 : index
      %24 = vector.load %arg8[%c0_12, %c0_13] : memref<16x48xf32, #tpu.memory_space<vmem>>, vector<16x48xf32>
      %c0_14 = arith.constant 0 : index
      %c0_15 = arith.constant 0 : index
      %25 = vector.load %arg4[%c0_14, %c0_15] : memref<1x48xf32, #tpu.memory_space<vmem>>, vector<1x48xf32>
      %26 = vector.broadcast %25 : vector<1x48xf32> to vector<16x48xf32>
      %27 = arith.addf %24, %26 : vector<16x48xf32>
      %cst_16 = arith.constant 0.000000e+00 : f32
      %28 = vector.broadcast %cst_16 : f32 to vector<16x48xf32>
      %29 = arith.cmpf ogt, %27, %28 : vector<16x48xf32>
      %cst_17 = arith.constant 0.000000e+00 : f32
      %30 = vector.broadcast %cst_17 : f32 to vector<16x48xf32>
      %31 = arith.minimumf %27, %30 : vector<16x48xf32>
      %32 = math.exp %31 : vector<16x48xf32>
      %cst_18 = arith.constant 1.000000e+00 : f32
      %33 = vector.broadcast %cst_18 : f32 to vector<16x48xf32>
      %34 = arith.subf %32, %33 : vector<16x48xf32>
      %35 = arith.select %29, %27, %34 : vector<16x48xi1>, vector<16x48xf32>
      %c0_19 = arith.constant 0 : index
      %c0_20 = arith.constant 0 : index
      %36 = vector.load %arg5[%c0_19, %c0_20] : memref<48x8xf32, #tpu.memory_space<vmem>>, vector<48x8xf32>
      %cst_21 = arith.constant dense<0.000000e+00> : vector<16x8xf32>
      %37 = tpu.matmul %35, %36, %cst_21 {dimension_numbers = #tpu.dot_dimension_numbers<[1], [0], [0], [1], [0, 0, 1, 1], [], []>} : vector<16x48xf32>, vector<48x8xf32>, vector<16x8xf32> -> vector<16x8xf32>
      %c0_22 = arith.constant 0 : index
      %c0_23 = arith.constant 0 : index
      %38 = vector.load %arg6[%c0_22, %c0_23] : memref<1x8xf32, #tpu.memory_space<vmem>>, vector<1x8xf32>
      %39 = vector.broadcast %38 : vector<1x8xf32> to vector<16x8xf32>
      %40 = arith.addf %37, %39 : vector<16x8xf32>
      %cst_24 = arith.constant 0.000000e+00 : f32
      %41 = vector.broadcast %cst_24 : f32 to vector<16x8xf32>
      %42 = arith.cmpf ogt, %40, %41 : vector<16x8xf32>
      %cst_25 = arith.constant 0.000000e+00 : f32
      %43 = vector.broadcast %cst_25 : f32 to vector<16x8xf32>
      %44 = arith.minimumf %40, %43 : vector<16x8xf32>
      %45 = math.exp %44 : vector<16x8xf32>
      %cst_26 = arith.constant 1.000000e+00 : f32
      %46 = vector.broadcast %cst_26 : f32 to vector<16x8xf32>
      %47 = arith.subf %45, %46 : vector<16x8xf32>
      %48 = arith.select %42, %40, %47 : vector<16x8xi1>, vector<16x8xf32>
      %cst_27 = arith.constant dense<0xFF800000> : vector<16xf32>
      %49 = vector.multi_reduction <maximumf>, %48, %cst_27 [1] : vector<16x8xf32> to vector<16xf32>
      %50 = vector.shape_cast %49 : vector<16xf32> to vector<16x1xf32>
      %51 = vector.broadcast %50 : vector<16x1xf32> to vector<16x8xf32>
      %52 = arith.subf %48, %51 : vector<16x8xf32>
      %53 = math.exp %52 : vector<16x8xf32>
      %cst_28 = arith.constant dense<0.000000e+00> : vector<16xf32>
      %54 = vector.multi_reduction <add>, %53, %cst_28 [1] : vector<16x8xf32> to vector<16xf32>
      %55 = vector.shape_cast %54 : vector<16xf32> to vector<16x1xf32>
      %56 = math.log %55 : vector<16x1xf32>
      %57 = arith.addf %50, %56 : vector<16x1xf32>
      %58 = vector.broadcast %57 : vector<16x1xf32> to vector<16x8xf32>
      %59 = arith.subf %48, %58 : vector<16x8xf32>
      %c0_29 = arith.constant 0 : index
      %c0_30 = arith.constant 0 : index
      %60 = vector.load %arg7[%c0_29, %c0_30] : memref<16x8xf32, #tpu.memory_space<vmem>>, vector<16x8xf32>
      tpu.vector_store %arg7[%c0_29, %c0_30], %59 {strides = array<i32>} : memref<16x8xf32, #tpu.memory_space<vmem>>, vector<16x8xf32>,
    } else {
    }
    return
  }
  func.func @transform_0(%arg0: i32, %arg1: i32) -> (i32, i32) {
    %c0_i32 = arith.constant 0 : i32
    return %arg0, %arg1 : i32, i32
  }
  func.func @transform_1(%arg0: i32, %arg1: i32) -> (i32, i32) {
    %c0_i32 = arith.constant 0 : i32
    %c0_i32_0 = arith.constant 0 : i32
    return %arg1, %c0_i32 : i32, i32
  }
  func.func @transform_2(%arg0: i32, %arg1: i32) -> (i32, i32) {
    %c0_i32 = arith.constant 0 : i32
    %c0_i32_0 = arith.constant 0 : i32
    %c0_i32_1 = arith.constant 0 : i32
    return %c0_i32, %c0_i32_0 : i32, i32
  }
  func.func @transform_3(%arg0: i32, %arg1: i32) -> (i32, i32) {
    %c0_i32 = arith.constant 0 : i32
    %c0_i32_0 = arith.constant 0 : i32
    %c0_i32_1 = arith.constant 0 : i32
    return %c0_i32, %c0_i32_0 : i32, i32
  }
  func.func @transform_4(%arg0: i32, %arg1: i32) -> (i32, i32) {
    %c0_i32 = arith.constant 0 : i32
    %c0_i32_0 = arith.constant 0 : i32
    %c0_i32_1 = arith.constant 0 : i32
    return %c0_i32, %c0_i32_0 : i32, i32
  }
  func.func @transform_5(%arg0: i32, %arg1: i32) -> (i32, i32) {
    %c0_i32 = arith.constant 0 : i32
    %c0_i32_0 = arith.constant 0 : i32
    return %arg0, %c0_i32 : i32, i32
  }
}

</mosaic_0001>

<llo_original>
// kernel: ngcn_forward.2
$region0: #{ngcn_forward.2}
  #allocation0 [shape = 'u32[]', space=smem, size = 0x4, offset = 0x4, fixed_abs, tag = 'smem constant byte address 0x4 - core index']
  #allocation1 [shape = 'u32[144,128]{1,0:T(1,128)}', space=vmem, size = 0x12000, scoped, tag = 'internal scratch']
  %s0 = inlined_call_operand.hbm [shape: f32[16,32], index: 0, kind: input, shape index: {}]
  %s1 = inlined_call_operand.hbm [shape: f32[32,48], index: 1, kind: input, shape index: {}]
  %s2 = inlined_call_operand.vmem [shape: f32[16,48], index: 2, kind: output, shape index: {}]
  %s3 = sld [smem:[#allocation0]]
  $region26: #{ngcn_forward.2} parent=0
    _
  %s5 = ssub.s32 1, %s3
  %s6 = scalar_select 0, %s5, %s3
  $region1: #{ngcn_forward.2} parent=0
    #allocation2 [shape = 'u8[8192]{0}', space=vmem, size = 0x2000, scoped, tag = 'input window, operand 0, single buffered']
    #allocation3 [shape = 's32[1]{0}', space=sflag, size = 0x4, scoped, tag = 'scoped memory for ngcn_forward.2']
    #allocation4 [shape = 'u8[16384]{0}', space=vmem, size = 0x4000, scoped, tag = 'input window, operand 1, single buffered']
    #allocation5 [shape = 's32[1]{0}', space=sflag, size = 0x4, scoped, tag = 'scoped memory for ngcn_forward.2']
    %7 = vsyncpa [#allocation3], 0
    %8 = vsyncpa [#allocation5], 0
    // Predicated region
    $region2: #{ngcn_forward.2} parent=1 // pred_check
      _
    $region3: #{ngcn_forward.2} parent=1 // pred_check_branch
      %10 = sbr.rel (0) target = $region5
    $region4: #{ngcn_forward.2} parent=1 // pred_region
      %s12 = ssub.s32 256, 256
      %13 = vsyncadd [#allocation3], %s12
      %s14 = sshll.u32 [#allocation2], 4
      %s15 = int_to_ptr.vmem [resolvable:$true] %s14
      %20 = dma.hbm_to_vmem [thread:$0]  %s0, 256, %s15, [#allocation3], 128, 128, 8
    $region5: #{ngcn_forward.2} parent=1 // pred_fallthru
      _
    // Predicated region
    $region6: #{ngcn_forward.2} parent=1 // pred_check
      _
    $region7: #{ngcn_forward.2} parent=1 // pred_check_branch
      %22 = sbr.rel (0) target = $region9
    $region8: #{ngcn_forward.2} parent=1 // pred_region
      %s24 = ssub.s32 512, 512
      %25 = vsyncadd [#allocation5], %s24
      %s26 = sshll.u32 [#allocation4], 4
      %s27 = int_to_ptr.vmem [resolvable:$true] %s26
      %32 = dma.hbm_to_vmem [thread:$0]  %s1, 512, %s27, [#allocation5], 128, 128, 8
    $region9: #{ngcn_forward.2} parent=1 // pred_fallthru
      _
    // Predicated region
    $region10: #{ngcn_forward.2} parent=1 // pred_check
      _
    $region11: #{ngcn_forward.2} parent=1 // pred_check_branch
      %34 = sbr.rel (0) target = $region13
    $region12: #{ngcn_forward.2} parent=1 // pred_region
      %35 = dma.done [#allocation3], 256
    $region13: #{ngcn_forward.2} parent=1 // pred_fallthru
      _
    // Predicated region
    $region14: #{ngcn_forward.2} parent=1 // pred_check
      _
    $region15: #{ngcn_forward.2} parent=1 // pred_check_branch
      %37 = sbr.rel (0) target = $region17
    $region16: #{ngcn_forward.2} parent=1 // pred_region
      %38 = dma.done [#allocation5], 512
    $region17: #{ngcn_forward.2} parent=1 // pred_fallthru
      _
    %v39 = vld [vmem:[#allocation2] sm:$0xff]
    %v40 = vld [vmem:[#allocation2 + $0x8] sm:$0xff]
    %v41 = vld [vmem:[#allocation4] sm:$0xff]
    %v42 = vld [vmem:[#allocation4 + $0x8] sm:$0xff]
    %v43 = vld [vmem:[#allocation4 + $0x10] sm:$0xff]
    %v44 = vld [vmem:[#allocation4 + $0x18] sm:$0xff]
    %vm45 = vcmask 261120
    %v47 = vsel %vm45, %v39, 0
    %v50 = vsel %vm45, %v40, 0
    %52 = vmatprep.subr.mxu0 0.0
    %53 = vmatpush1.msra.mxu0 %v41
    %54 = vmatprep.subr.mxu0 0.0
    %55 = vmatpush1.msra.mxu0 %v42
    %56 = vmatprep.subr.mxu0 0.0
    %57 = vmatpush1.msra.mxu0 %v43
    %58 = vmatprep.subr.mxu0 0.0
    %59 = vmatpush1.msra.mxu0 %v44
    %60 = vmatprep.subr.mxu0 0.0
    %61 = vmatpush1.msra.mxu0 0.0
    %62 = vmatprep.subr.mxu0 0.0
    %63 = vmatpush1.msra.mxu0 0.0
    %64 = vmatprep.subr.mxu0 0.0
    %65 = vmatpush1.msra.mxu0 0.0
    %66 = vmatprep.subr.mxu0 0.0
    %67 = vmatpush1.msra.mxu0 0.0
    %68 = vmatprep.subr.mxu0 0.0
    %69 = vmatpush1.msra.mxu0 0.0
    %70 = vmatprep.subr.mxu0 0.0
    %71 = vmatpush1.msra.mxu0 0.0
    %72 = vmatprep.subr.mxu0 0.0
    %73 = vmatpush1.msra.mxu0 0.0
    %74 = vmatprep.subr.mxu0 0.0
    %75 = vmatpush1.msra.mxu0 0.0
    %76 = vmatprep.subr.mxu0 0.0
    %77 = vmatpush1.msra.mxu0 0.0
    %78 = vmatprep.subr.mxu0 0.0
    %79 = vmatpush1.msra.mxu0 0.0
    %80 = vmatprep.subr.mxu0 0.0
    %81 = vmatpush1.msra.mxu0 0.0
    %82 = vmatprep.subr.mxu0 0.0
    %83 = vmatpush1.msra.mxu0 0.0
    %84 = vmatprep.subr.mxu0 0.0
    %85 = vmatpush1.msra.mxu0 0.0
    %86 = vmatprep.subr.mxu0 0.0
    %87 = vmatpush1.msra.mxu0 0.0
    %88 = vmatprep.subr.mxu0 0.0
    %89 = vmatpush1.msra.mxu0 0.0
    %90 = vmatprep.subr.mxu0 0.0
    %91 = vmatpush1.msra.mxu0 0.0
    %92 = vmatprep.subr.mxu0 0.0
    %93 = vmatpush1.msra.mxu0 0.0
    %94 = vmatprep.subr.mxu0 0.0
    %95 = vmatpush1.msra.mxu0 0.0
    %96 = vmatprep.subr.mxu0 0.0
    %97 = vmatpush1.msra.mxu0 0.0
    %98 = vmatprep.subr.mxu0 0.0
    %99 = vmatpush1.msra.mxu0 0.0
    %100 = vmatprep.subr.mxu0 0.0
    %101 = vmatpush1.msra.mxu0 0.0
    %102 = vmatprep.subr.mxu0 0.0
    %103 = vmatpush1.msra.mxu0 0.0
    %104 = vmatprep.subr.mxu0 0.0
    %105 = vmatpush1.msra.mxu0 0.0
    %106 = vmatprep.subr.mxu0 0.0
    %107 = vmatpush1.msra.mxu0 0.0
    %108 = vmatprep.subr.mxu0 0.0
    %109 = vmatpush1.msra.mxu0 0.0
    %110 = vmatprep.subr.mxu0 0.0
    %111 = vmatpush1.msra.mxu0 0.0
    %112 = vmatprep.subr.mxu0 0.0
    %113 = vmatpush1.msra.mxu0 0.0
    %114 = vmatprep.subr.mxu0 0.0
    %115 = vmatpush1.msra.mxu0 0.0
    %116 = vmatprep.mubr.f32.mxu0 0.0
    %117 = vmatmul.mubr.f32.gmra.mrb[0].mxu0 %v47
    %v118 = vpop.f32.mrb[0].mxu0
    %v119 = vadd.f32 0.0, %v118
    %v120 = vpop.f32.mrb[0].mxu0
    %121 = vmatprep.mubr.f32.mxu0 0.0
    %122 = vmatmul.mubr.f32.gmra.mrb[0].mxu0 %v50
    %v123 = vpop.f32.mrb[0].mxu0
    %v124 = vadd.f32 0.0, %v123
    %v125 = vpop.f32.mrb[0].mxu0
    %126 = vdwg.mxu0
    %vm127 = vcmask 392192
    %128 = vst.msk [vmem:[%s2] sm:$0xff] %vm127, %v119
    %129 = vst.msk [vmem:[%s2 + $0x8] sm:$0xff] %vm127, %v124
    // Predicated region
    $region18: #{ngcn_forward.2} parent=1 // pred_check
      _
    $region19: #{ngcn_forward.2} parent=1 // pred_check_branch
      %131 = sbr.rel (0) target = $region21
    $region20: #{ngcn_forward.2} parent=1 // pred_region
      _
    $region21: #{ngcn_forward.2} parent=1 // pred_fallthru
      _
    // Predicated region
    $region22: #{ngcn_forward.2} parent=1 // pred_check
      _
    $region23: #{ngcn_forward.2} parent=1 // pred_check_branch
      %133 = sbr.rel (0) target = $region25
    $region24: #{ngcn_forward.2} parent=1 // pred_region
      _
    $region25: #{ngcn_forward.2} parent=1 // pred_fallthru
      _
    %134 = vsyncpa [#allocation3], 1
    %135 = vsyncpa [#allocation5], 1

// kernel: ngcn_forward.3
$region0: #{ngcn_forward.3}
  #allocation0 [shape = 'u32[]', space=smem, size = 0x4, offset = 0x4, fixed_abs, tag = 'smem constant byte address 0x4 - core index']
  #allocation1 [shape = 'u32[144,128]{1,0:T(1,128)}', space=vmem, size = 0x12000, scoped, tag = 'internal scratch']
  #allocation2 [shape = 'f32[16,48]{1,0:T(8,128)}', space=vmem, size = 0x2000, scoped, tag = 'scratch operand']
  %s0 = inlined_call_operand.vmem [shape: f32[16,16], index: 0, kind: input, shape index: {}]
  %s1 = inlined_call_operand.vmem [shape: f32[16,48], index: 1, kind: input, shape index: {}]
  %s2 = inlined_call_operand.vmem [shape: f32[1,48], index: 2, kind: input, shape index: {}]
  %s3 = inlined_call_operand.vmem [shape: f32[48,8], index: 3, kind: input, shape index: {}]
  %s4 = inlined_call_operand.vmem [shape: f32[1,8], index: 4, kind: input, shape index: {}]
  %s5 = inlined_call_operand.vmem [shape: f32[16,8], index: 5, kind: output, shape index: {}]
  %s6 = sld [smem:[#allocation0]]
  $region38: #{ngcn_forward.3} parent=0
    _
  %s8 = ssub.s32 1, %s6
  %s9 = scalar_select 0, %s8, %s6
  // Predicated region
  $region2: #{ngcn_forward.3} parent=0 // pred_check
    _
  $region3: #{ngcn_forward.3} parent=0 // pred_check_branch
    %11 = sbr.rel (0) target = $region5
  $region4: #{ngcn_forward.3} parent=0 // pred_region
    _
  $region5: #{ngcn_forward.3} parent=0 // pred_fallthru
    _
  // Predicated region
  $region6: #{ngcn_forward.3} parent=0 // pred_check
    _
  $region7: #{ngcn_forward.3} parent=0 // pred_check_branch
    %13 = sbr.rel (0) target = $region9
  $region8: #{ngcn_forward.3} parent=0 // pred_region
    _
  $region9: #{ngcn_forward.3} parent=0 // pred_fallthru
    _
  // Predicated region
  $region10: #{ngcn_forward.3} parent=0 // pred_check
    _
  $region11: #{ngcn_forward.3} parent=0 // pred_check_branch
    %15 = sbr.rel (0) target = $region13
  $region12: #{ngcn_forward.3} parent=0 // pred_region
    _
  $region13: #{ngcn_forward.3} parent=0 // pred_fallthru
    _
  // Predicated region
  $region14: #{ngcn_forward.3} parent=0 // pred_check
    _
  $region15: #{ngcn_forward.3} parent=0 // pred_check_branch
    %17 = sbr.rel (0) target = $region17
  $region16: #{ngcn_forward.3} parent=0 // pred_region
    _
  $region17: #{ngcn_forward.3} parent=0 // pred_fallthru
    _
  // Predicated region
  $region18: #{ngcn_forward.3} parent=0 // pred_check
    _
  $region19: #{ngcn_forward.3} parent=0 // pred_check_branch
    %19 = sbr.rel (0) target = $region21
  $region20: #{ngcn_forward.3} parent=0 // pred_region
    _
  $region21: #{ngcn_forward.3} parent=0 // pred_fallthru
    _
  %p21 = scmp.eq.s32.totalorder 0, 0
  // Predicated region
  $region22: #{ngcn_forward.3} parent=0 // pred_check
    %p22 = pneg %p21
  $region23: #{ngcn_forward.3} parent=0 // pred_check_branch
    %24 = sbr.rel (%p22) target = $region25
  $region24: #{ngcn_forward.3} parent=0 // pred_region
    %vm25 = vcmask 392192
    %26 = vst.msk [vmem:[#allocation2] sm:$0xff] %vm25, 0.0
    %27 = vst.msk [vmem:[#allocation2 + $0x8] sm:$0xff] %vm25, 0.0
  $region25: #{ngcn_forward.3} parent=0 // pred_fallthru
    _
  %v28 = vld [vmem:[%s0] sm:$0xff]
  %v29 = vld [vmem:[%s0 + $0x8] sm:$0xff]
  %v30 = vld [vmem:[%s1] sm:$0xff]
  %v31 = vld [vmem:[%s1 + $0x8] sm:$0xff]
  %v32 = vpack.c.bf16 %v31, %v30
  %v33 = vpack.c.bf16 %v29, %v28
  %vm34 = vcmask 130048
  %v36 = vsel %vm34, %v33, 0
  %38 = vmatprep.subr.bf16.mxu0 0
  %39 = vmatpush1.bf16.msra.mxu0 %v32
  %40 = vmatprep.subr.bf16.mxu0 0
  %41 = vmatpush1.bf16.msra.mxu0 0
  %42 = vmatprep.subr.bf16.mxu0 0
  %43 = vmatpush1.bf16.msra.mxu0 0
  %44 = vmatprep.subr.bf16.mxu0 0
  %45 = vmatpush1.bf16.msra.mxu0 0
  %46 = vmatprep.subr.bf16.mxu0 0
  %47 = vmatpush1.bf16.msra.mxu0 0
  %48 = vmatprep.subr.bf16.mxu0 0
  %49 = vmatpush1.bf16.msra.mxu0 0
  %50 = vmatprep.subr.bf16.mxu0 0
  %51 = vmatpush1.bf16.msra.mxu0 0
  %52 = vmatprep.subr.bf16.mxu0 0
  %53 = vmatpush1.bf16.msra.mxu0 0
  %54 = vmatprep.subr.bf16.mxu0 0
  %55 = vmatpush1.bf16.msra.mxu0 0
  %56 = vmatprep.subr.bf16.mxu0 0
  %57 = vmatpush1.bf16.msra.mxu0 0
  %58 = vmatprep.subr.bf16.mxu0 0
  %59 = vmatpush1.bf16.msra.mxu0 0
  %60 = vmatprep.subr.bf16.mxu0 0
  %61 = vmatpush1.bf16.msra.mxu0 0
  %62 = vmatprep.subr.bf16.mxu0 0
  %63 = vmatpush1.bf16.msra.mxu0 0
  %64 = vmatprep.subr.bf16.mxu0 0
  %65 = vmatpush1.bf16.msra.mxu0 0
  %66 = vmatprep.subr.bf16.mxu0 0
  %67 = vmatpush1.bf16.msra.mxu0 0
  %68 = vmatprep.subr.bf16.mxu0 0
  %69 = vmatpush1.bf16.msra.mxu0 0
  %70 = vmatprep.mubr.bf16.mxu0 0
  %71 = vmatmul.mubr.bf16.gmra.mrb[0].mxu0 %v36
  %v72 = vpop.f32.mrb[0].mxu0
  %v73 = vadd.f32 0.0, %v72
  %v74 = vpop.f32.mrb[0].mxu0
  %v75 = vpop.f32.mrb[0].mxu0
  %v76 = vadd.f32 0.0, %v75
  %v77 = vpop.f32.mrb[0].mxu0
  %78 = vdwg.mxu0
  %v79 = vmul.f32 %v28, %v28
  %v80 = vmul.f32 %v29, %v29
  %v81 = vpack.c.bf16 %v80, %v79
  %83 = vrot.lane.b32.xlu0 %v32, 112
  %v84 = vpop.permute.xlu0 %83
  %v87 = vsel %vm34, %v81, 0
  %89 = vmatprep.subr.bf16.mxu0 0
  %90 = vmatpush1.bf16.msra.mxu0 %v84
  %91 = vmatprep.subr.bf16.mxu0 0
  %92 = vmatpush1.bf16.msra.mxu0 0
  %93 = vmatprep.subr.bf16.mxu0 0
  %94 = vmatpush1.bf16.msra.mxu0 0
  %95 = vmatprep.subr.bf16.mxu0 0
  %96 = vmatpush1.bf16.msra.mxu0 0
  %97 = vmatprep.subr.bf16.mxu0 0
  %98 = vmatpush1.bf16.msra.mxu0 0
  %99 = vmatprep.subr.bf16.mxu0 0
  %100 = vmatpush1.bf16.msra.mxu0 0
  %101 = vmatprep.subr.bf16.mxu0 0
  %102 = vmatpush1.bf16.msra.mxu0 0
  %103 = vmatprep.subr.bf16.mxu0 0
  %104 = vmatpush1.bf16.msra.mxu0 0
  %105 = vmatprep.subr.bf16.mxu0 0
  %106 = vmatpush1.bf16.msra.mxu0 0
  %107 = vmatprep.subr.bf16.mxu0 0
  %108 = vmatpush1.bf16.msra.mxu0 0
  %109 = vmatprep.subr.bf16.mxu0 0
  %110 = vmatpush1.bf16.msra.mxu0 0
  %111 = vmatprep.subr.bf16.mxu0 0
  %112 = vmatpush1.bf16.msra.mxu0 0
  %113 = vmatprep.subr.bf16.mxu0 0
  %114 = vmatpush1.bf16.msra.mxu0 0
  %115 = vmatprep.subr.bf16.mxu0 0
  %116 = vmatpush1.bf16.msra.mxu0 0
  %117 = vmatprep.subr.bf16.mxu0 0
  %118 = vmatpush1.bf16.msra.mxu0 0
  %119 = vmatprep.subr.bf16.mxu0 0
  %120 = vmatpush1.bf16.msra.mxu0 0
  %121 = vmatprep.mubr.bf16.mxu0 0
  %122 = vmatmul.mubr.bf16.gmra.mrb[0].mxu0 %v87
  %v123 = vpop.f32.mrb[0].mxu0
  %v124 = vadd.f32 0.0, %v123
  %v125 = vpop.f32.mrb[0].mxu0
  %v126 = vpop.f32.mrb[0].mxu0
  %v127 = vadd.f32 0.0, %v126
  %v128 = vpop.f32.mrb[0].mxu0
  %129 = vdwg.mxu0
  %v130 = vmul.f32 %v79, %v28
  %v131 = vmul.f32 %v80, %v29
  %v132 = vpack.c.bf16 %v131, %v130
  %133 = vrot.lane.b32.xlu0 %v32, 96
  %v134 = vpop.permute.xlu0 %133
  %v137 = vsel %vm34, %v132, 0
  %139 = vmatprep.subr.bf16.mxu0 0
  %140 = vmatpush1.bf16.msra.mxu0 %v134
  %141 = vmatprep.subr.bf16.mxu0 0
  %142 = vmatpush1.bf16.msra.mxu0 0
  %143 = vmatprep.subr.bf16.mxu0 0
  %144 = vmatpush1.bf16.msra.mxu0 0
  %145 = vmatprep.subr.bf16.mxu0 0
  %146 = vmatpush1.bf16.msra.mxu0 0
  %147 = vmatprep.subr.bf16.mxu0 0
  %148 = vmatpush1.bf16.msra.mxu0 0
  %149 = vmatprep.subr.bf16.mxu0 0
  %150 = vmatpush1.bf16.msra.mxu0 0
  %151 = vmatprep.subr.bf16.mxu0 0
  %152 = vmatpush1.bf16.msra.mxu0 0
  %153 = vmatprep.subr.bf16.mxu0 0
  %154 = vmatpush1.bf16.msra.mxu0 0
  %155 = vmatprep.subr.bf16.mxu0 0
  %156 = vmatpush1.bf16.msra.mxu0 0
  %157 = vmatprep.subr.bf16.mxu0 0
  %158 = vmatpush1.bf16.msra.mxu0 0
  %159 = vmatprep.subr.bf16.mxu0 0
  %160 = vmatpush1.bf16.msra.mxu0 0
  %161 = vmatprep.subr.bf16.mxu0 0
  %162 = vmatpush1.bf16.msra.mxu0 0
  %163 = vmatprep.subr.bf16.mxu0 0
  %164 = vmatpush1.bf16.msra.mxu0 0
  %165 = vmatprep.subr.bf16.mxu0 0
  %166 = vmatpush1.bf16.msra.mxu0 0
  %167 = vmatprep.subr.bf16.mxu0 0
  %168 = vmatpush1.bf16.msra.mxu0 0
  %169 = vmatprep.subr.bf16.mxu0 0
  %170 = vmatpush1.bf16.msra.mxu0 0
  %171 = vmatprep.mubr.bf16.mxu0 0
  %172 = vmatmul.mubr.bf16.gmra.mrb[0].mxu0 %v137
  %v173 = vpop.f32.mrb[0].mxu0
  %v174 = vadd.f32 0.0, %v173
  %v175 = vpop.f32.mrb[0].mxu0
  %v176 = vpop.f32.mrb[0].mxu0
  %v177 = vadd.f32 0.0, %v176
  %v178 = vpop.f32.mrb[0].mxu0
  %179 = vdwg.mxu0
  %v180 = vld [vmem:[#allocation2] sm:$0xff]
  %v181 = vld [vmem:[#allocation2 + $0x8] sm:$0xff]
  %184 = vrot.lane.b32.xlu0 %v124, 16
  %v185 = vpop.permute.xlu0 %184
  %186 = vrot.lane.b32.xlu0 %v127, 16
  %v187 = vpop.permute.xlu0 %186
  %192 = vrot.lane.b32.xlu0 %v174, 32
  %v193 = vpop.permute.xlu0 %192
  %194 = vrot.lane.b32.xlu0 %v177, 32
  %v195 = vpop.permute.xlu0 %194
  %v198 = vsel %vm34, %v73, %v185
  %v199 = vsel %vm34, %v76, %v187
  %vm200 = vcmask 261120
  %v201 = vsel %vm200, %v198, %v193
  %v202 = vsel %vm200, %v199, %v195
  %v203 = vadd.f32 %v180, %v201
  %v204 = vadd.f32 %v181, %v202
  %vm205 = vcmask 392192
  %206 = vst.msk [vmem:[#allocation2] sm:$0xff] %vm205, %v203
  %207 = vst.msk [vmem:[#allocation2 + $0x8] sm:$0xff] %vm205, %v204
  // Predicated region
  $region26: #{ngcn_forward.3} parent=0 // pred_check
    %p208 = pneg %p21
  $region27: #{ngcn_forward.3} parent=0 // pred_check_branch
    %210 = sbr.rel (%p208) target = $region29
  $region28: #{ngcn_forward.3} parent=0 // pred_region
    %v211 = vld [vmem:[#allocation2] sm:$0xff]
    %v212 = vld [vmem:[#allocation2 + $0x8] sm:$0xff]
    %v213 = vld [vmem:[%s2] sm:$0x1]
    %v215 = vlaneseq
    %v216 = vshrl.u32 %v215, 7
    %v217 = vsub.s32 0, %v216
    %v218 = vrot.slane %v213, %v217
    %v220 = vadd.f32 %v211, %v218
    %v221 = vadd.f32 %v212, %v218
    %vm222 = vcmp.gt.f32.partialorder %v220, 0.0
    %vm223 = vcmp.gt.f32.partialorder %v221, 0.0
    %v224 = vmin.f32 %v220, 0.0
    %v225 = vmin.f32 %v221, 0.0
    %v226 = vmul.f32 %v224, 1.442695
    %v227 = vpow.pop %v226
    %v228 = vmul.f32 %v225, 1.442695
    %v229 = vpow.pop %v228
    %v230 = vsub.f32 %v227, 1.0
    %v231 = vsub.f32 %v229, 1.0
    %v232 = vsel %vm222, %v220, %v230
    %v233 = vsel %vm223, %v221, %v231
    %v234 = vld [vmem:[%s3] sm:$0xff]
    %v235 = vld [vmem:[%s3 + $0x8] sm:$0xff]
    %v236 = vld [vmem:[%s3 + $0x10] sm:$0xff]
    %v237 = vld [vmem:[%s3 + $0x18] sm:$0xff]
    %v238 = vld [vmem:[%s3 + $0x20] sm:$0xff]
    %v239 = vld [vmem:[%s3 + $0x28] sm:$0xff]
    %v240 = vld [vmem:[%s4] sm:$0x1]
    %v242 = vlaneseq
    %v243 = vshrl.u32 %v242, 7
    %v244 = vsub.s32 0, %v243
    %v245 = vrot.slane %v240, %v244
    %v248 = vsel %vm205, %v232, 0
    %v251 = vsel %vm205, %v233, 0
    %253 = vmatprep.subr.mxu0 0.0
    %254 = vmatpush1.msra.mxu0 %v234
    %255 = vmatprep.subr.mxu0 0.0
    %256 = vmatpush1.msra.mxu0 %v235
    %257 = vmatprep.subr.mxu0 0.0
    %258 = vmatpush1.msra.mxu0 %v236
    %259 = vmatprep.subr.mxu0 0.0
    %260 = vmatpush1.msra.mxu0 %v237
    %261 = vmatprep.subr.mxu0 0.0
    %262 = vmatpush1.msra.mxu0 %v238
    %263 = vmatprep.subr.mxu0 0.0
    %264 = vmatpush1.msra.mxu0 %v239
    %265 = vmatprep.subr.mxu0 0.0
    %266 = vmatpush1.msra.mxu0 0.0
    %267 = vmatprep.subr.mxu0 0.0
    %268 = vmatpush1.msra.mxu0 0.0
    %269 = vmatprep.subr.mxu0 0.0
    %270 = vmatpush1.msra.mxu0 0.0
    %271 = vmatprep.subr.mxu0 0.0
    %272 = vmatpush1.msra.mxu0 0.0
    %273 = vmatprep.subr.mxu0 0.0
    %274 = vmatpush1.msra.mxu0 0.0
    %275 = vmatprep.subr.mxu0 0.0
    %276 = vmatpush1.msra.mxu0 0.0
    %277 = vmatprep.subr.mxu0 0.0
    %278 = vmatpush1.msra.mxu0 0.0
    %279 = vmatprep.subr.mxu0 0.0
    %280 = vmatpush1.msra.mxu0 0.0
    %281 = vmatprep.subr.mxu0 0.0
    %282 = vmatpush1.msra.mxu0 0.0
    %283 = vmatprep.subr.mxu0 0.0
    %284 = vmatpush1.msra.mxu0 0.0
    %285 = vmatprep.subr.mxu0 0.0
    %286 = vmatpush1.msra.mxu0 0.0
    %287 = vmatprep.subr.mxu0 0.0
    %288 = vmatpush1.msra.mxu0 0.0
    %289 = vmatprep.subr.mxu0 0.0
    %290 = vmatpush1.msra.mxu0 0.0
    %291 = vmatprep.subr.mxu0 0.0
    %292 = vmatpush1.msra.mxu0 0.0
    %293 = vmatprep.subr.mxu0 0.0
    %294 = vmatpush1.msra.mxu0 0.0
    %295 = vmatprep.subr.mxu0 0.0
    %296 = vmatpush1.msra.mxu0 0.0
    %297 = vmatprep.subr.mxu0 0.0
    %298 = vmatpush1.msra.mxu0 0.0
    %299 = vmatprep.subr.mxu0 0.0
    %300 = vmatpush1.msra.mxu0 0.0
    %301 = vmatprep.subr.mxu0 0.0
    %302 = vmatpush1.msra.mxu0 0.0
    %303 = vmatprep.subr.mxu0 0.0
    %304 = vmatpush1.msra.mxu0 0.0
    %305 = vmatprep.subr.mxu0 0.0
    %306 = vmatpush1.msra.mxu0 0.0
    %307 = vmatprep.subr.mxu0 0.0
    %308 = vmatpush1.msra.mxu0 0.0
    %309 = vmatprep.subr.mxu0 0.0
    %310 = vmatpush1.msra.mxu0 0.0
    %311 = vmatprep.subr.mxu0 0.0
    %312 = vmatpush1.msra.mxu0 0.0
    %313 = vmatprep.subr.mxu0 0.0
    %314 = vmatpush1.msra.mxu0 0.0
    %315 = vmatprep.subr.mxu0 0.0
    %316 = vmatpush1.msra.mxu0 0.0
    %317 = vmatprep.mubr.f32.mxu0 0.0
    %318 = vmatmul.mubr.f32.gmra.mrb[0].mxu0 %v248
    %v319 = vpop.f32.mrb[0].mxu0
    %v320 = vadd.f32 %v245, %v319
    %v321 = vpop.f32.mrb[0].mxu0
    %322 = vmatprep.mubr.f32.mxu0 0.0
    %323 = vmatmul.mubr.f32.gmra.mrb[0].mxu0 %v251
    %v324 = vpop.f32.mrb[0].mxu0
    %v325 = vadd.f32 %v245, %v324
    %v326 = vpop.f32.mrb[0].mxu0
    %327 = vdwg.mxu0
    %vm328 = vcmp.gt.f32.partialorder %v320, 0.0
    %vm329 = vcmp.gt.f32.partialorder %v325, 0.0
    %v330 = vmin.f32 %v320, 0.0
    %v331 = vmin.f32 %v325, 0.0
    %v332 = vmul.f32 %v330, 1.442695
    %v333 = vpow.pop %v332
    %v334 = vmul.f32 %v331, 1.442695
    %v335 = vpow.pop %v334
    %v336 = vsub.f32 %v333, 1.0
    %v337 = vsub.f32 %v335, 1.0
    %v338 = vsel %vm328, %v320, %v336
    %v339 = vsel %vm329, %v325, %v337
    %vm340 = vcmask 64512
    %v341 = vsel %vm340, %v338, -inf
    %342 = vmax.xlane.f32.xlu0 %v341
    %v343 = vpop.xlane.xlu0 %342
    %v344 = vsel %vm340, %v339, -inf
    %345 = vmax.xlane.f32.xlu0 %v344
    %v346 = vpop.xlane.xlu0 %345
    %v347 = vsub.f32 %v338, %v343
    %v348 = vsub.f32 %v339, %v346
    %v349 = vmul.f32 %v347, 1.442695
    %v350 = vpow.pop %v349
    %v351 = vmul.f32 %v348, 1.442695
    %v352 = vpow.pop %v351
    %v353 = vsel %vm340, %v350, 0.0
    %354 = vadd.xlane.f32.xlu0 %v353
    %v355 = vpop.xlane.xlu0 %354
    %v356 = vsel %vm340, %v352, 0.0
    %357 = vadd.xlane.f32.xlu0 %v356
    %v358 = vpop.xlane.xlu0 %357
    %v359 = vlog2.pop %v355
    %v360 = vmul.f32 %v359, 0.6931472
    %v361 = vlog2.pop %v358
    %v362 = vmul.f32 %v361, 0.6931472
    %v363 = vadd.f32 %v343, %v360
    %v364 = vadd.f32 %v346, %v362
    %v365 = vsub.f32 %v338, %v363
    %v366 = vsub.f32 %v339, %v364
    %367 = vst.msk [vmem:[%s5] sm:$0xff] %vm340, %v365
    %368 = vst.msk [vmem:[%s5 + $0x8] sm:$0xff] %vm340, %v366
  $region29: #{ngcn_forward.3} parent=0 // pred_fallthru
    _
  // Predicated region
  $region30: #{ngcn_forward.3} parent=0 // pred_check
    _
  $region31: #{ngcn_forward.3} parent=0 // pred_check_branch
    %370 = sbr.rel (0) target = $region33
  $region32: #{ngcn_forward.3} parent=0 // pred_region
    _
  $region33: #{ngcn_forward.3} parent=0 // pred_fallthru
    _
  // Predicated region
  $region34: #{ngcn_forward.3} parent=0 // pred_check
    _
  $region35: #{ngcn_forward.3} parent=0 // pred_check_branch
    %372 = sbr.rel (0) target = $region37
  $region36: #{ngcn_forward.3} parent=0 // pred_region
    _
  $region37: #{ngcn_forward.3} parent=0 // pred_fallthru
    _

</llo_original>
